<compile_context>
chip_gen: v5e
topology: v5e:2x2
jax: 0.10.0
libtpu: 0.0.40
codegen_flags: <defaults>
</compile_context>

<pallas_src>
import functools

import jax
import jax.numpy as jnp
from jax.experimental import pallas as pl
from jax.experimental.pallas import tpu as pltpu

SUBLANE = 8  # f32 sublane width (second-to-last dim granularity)


def _round_up(x, m):
    return ((x + m - 1) // m) * m


def _fused_mlp_kernel(*refs, n_linear: int):
    """Fused MLP body.

    refs = (x_ref, w0_ref, b0_ref, w1_ref, b1_ref, ..., o_ref), all VMEM blocks:
      x_ref : (TB, D0)
      wl_ref: (Dl, Dl+1)   -- full-array block, resident across the batch grid
      bl_ref: (1,  Dl+1)   -- f32
      o_ref : (TB, DL)
    Chains y = relu(x @ W + b) for every layer except the last (no ReLU on the last).
    """
    x_ref = refs[0]
    o_ref = refs[-1]
    h = x_ref[...]
    for l in range(n_linear):
        w = refs[1 + 2 * l][...]
        b = refs[2 + 2 * l][...]
        if h.dtype != w.dtype:          # only hits when weights were pre-cast (e.g. bf16)
            h = h.astype(w.dtype)
        # MXU matmul with f32 accumulation; bias added in f32.
        h = jnp.dot(h, w, preferred_element_type=jnp.float32) + b.astype(jnp.float32)
        if l != n_linear - 1:
            h = jnp.maximum(h, 0.0)
            # TODO(synk): training-mode dropout (pltpu.prng_seed + pltpu.prng_random_bits
            # mask) not implemented; nn.Dropout in eval mode is the identity reproduced here.
    o_ref[...] = h.astype(o_ref.dtype)


def init_forecasting_params(key, in_dim, hid_dim, out_dim, n_layers, dtype=jnp.float32):
    """Init matching the PyTorch module's layer shapes.

    Layers: Linear(in_dim, hid_dim), (n_layers-1) x Linear(hid_dim, hid_dim),
            Linear(hid_dim, out_dim).  Weights stored as [in_features, out_features].
    """
    dims = [in_dim] + [hid_dim] * n_layers + [out_dim]
    params = []
    for i in range(len(dims) - 1):
        fan_in, fan_out = dims[i], dims[i + 1]
        key, kw, kb = jax.random.split(key, 3)
        bound = 1.0 / jnp.sqrt(jnp.asarray(fan_in, dtype))
        w = jax.random.uniform(kw, (fan_in, fan_out), dtype, -bound, bound)
        b = jax.random.uniform(kb, (fan_out,), dtype, -bound, bound)
        params.append((w, b))
    return params


def prepare_params_for_tpu(params, compute_dtype=None):
    """One-time layout/dtype plumbing (do this once, outside the hot path).

    * Biases are pre-reshaped to (1, out_features) and kept in f32 (added post-accumulation).
    * If compute_dtype is given (e.g. jnp.bfloat16), weights are cast ONCE here so the kernel
      never re-casts grid-invariant data and the weight HBM/VMEM footprint is halved.
    No zero-padding of feature dims: full-array weight blocks are legal for any shape, and the
    matmuls are exact without it.
    """
    prepared = []
    for w, b in params:
        w_c = w.astype(compute_dtype) if compute_dtype is not None else w
        b_r = b.reshape(1, -1).astype(jnp.float32)
        prepared.append((w_c, b_r))
    return prepared


def _vmem_budget_bytes(prepared_params, tb, in_dim, out_dim, act_itemsize):
    """Scoped-VMEM budget: 2x resident weights (default double-buffer allocation, DMA'd once)
    + double-buffered activation in/out tiles + f32 intermediate headroom."""
    weight_bytes = 0
    max_feat = in_dim
    for w, b in prepared_params:
        weight_bytes += w.size * w.dtype.itemsize + b.size * b.dtype.itemsize
        max_feat = max(max_feat, w.shape[1])
    act_bytes = 2 * tb * (in_dim + out_dim) * act_itemsize
    inter_bytes = 4 * tb * max_feat * 4
    budget = 2 * weight_bytes + act_bytes + inter_bytes + (4 << 20)
    # Floor at 32 MiB (cheap, fits every generation); cap at v7x's 64 MiB per-TC physical VMEM.
    return int(min(max(budget, 32 << 20), 64 << 20))


def forecasting_model_forward(x, prepared_params, *, batch_tile=512):
    """Forward pass of the full MLP as a single fused Pallas kernel.

    x: [batch, in_dim] -> [batch, out_dim].  `prepared_params` from prepare_params_for_tpu.
    """
    B, in_dim = x.shape
    out_dim = prepared_params[-1][0].shape[1]
    n_linear = len(prepared_params)

    # Batch tiling: tb is always a multiple of 8 (sanitized) and never larger than needed.
    tb = max(SUBLANE, min(_round_up(B, SUBLANE), _round_up(int(batch_tile), SUBLANE)))
    b_pad = _round_up(B, tb)
    if b_pad != B:
        # Batch-only zero pad (no feature padding); skipped entirely when B divides evenly.
        x_in = jnp.zeros((b_pad, in_dim), x.dtype).at[:B, :].set(x)
    else:
        x_in = x

    # Input tile: last dim == full array dim (legal for any in_dim), rows tiled over the grid.
    in_specs = [pl.BlockSpec((tb, in_dim), lambda i: (i, 0))]
    flat_inputs = [x_in]
    for w, b in prepared_params:
        # Full-array blocks, constant index_map -> resident in VMEM, DMA'd once per call.
        in_specs.append(pl.BlockSpec(w.shape, lambda i: (0, 0)))
        in_specs.append(pl.BlockSpec(b.shape, lambda i: (0, 0)))
        flat_inputs.append(w)
        flat_inputs.append(b)

    vmem_limit = _vmem_budget_bytes(prepared_params, tb, in_dim, out_dim, x.dtype.itemsize)

    out_p = pl.pallas_call(
        functools.partial(_fused_mlp_kernel, n_linear=n_linear),
        out_shape=jax.ShapeDtypeStruct((b_pad, out_dim), x.dtype),
        grid=(b_pad // tb,),
        in_specs=in_specs,
        # True-width output (no 128-lane pad slab, no post-slice feature copy).
        out_specs=pl.BlockSpec((tb, out_dim), lambda i: (i, 0)),
        compiler_params=pltpu.CompilerParams(
            dimension_semantics=("parallel",),   # shard batch tiles across TCs on v7x
            vmem_limit_bytes=vmem_limit,
        ),
    )(*flat_inputs)

    return out_p if b_pad == B else out_p[:B]


if __name__ == "__main__":
    # Small shapes consistent with the module's forward: x is [batch, in_dim].
    batch, in_dim, hid_dim, out_dim, n_layers, dropout = 8, 32, 32, 16, 3, 0.1

    key = jax.random.PRNGKey(0)
    kx, kp = jax.random.split(key)
    x = jax.random.normal(kx, (batch, in_dim), jnp.float32)
    params = init_forecasting_params(kp, in_dim, hid_dim, out_dim, n_layers)

    def reference(xv, ps):
        h = xv
        for i, (w, b) in enumerate(ps):
            h = h @ w + b
            if i != len(ps) - 1:
                h = jnp.maximum(h, 0.0)
        return h

    # --- f32 path (exact) -------------------------------------------------------------
    prepared = prepare_params_for_tpu(params)        # one-time prep
    fwd = jax.jit(forecasting_model_forward)
    out = jax.block_until_ready(fwd(x, prepared))
    assert out.shape == (batch, out_dim), out.shape
    assert jnp.allclose(out, reference(x, params), atol=1e-5, rtol=1e-5)

    # --- multi-tile grid + batch-padding path (B not a whole number of tiles) ----------
    B2 = 520
    x2 = jax.random.normal(kx, (B2, in_dim), jnp.float32)
    fwd_tiled = jax.jit(functools.partial(forecasting_model_forward, batch_tile=256))
    out2 = jax.block_until_ready(fwd_tiled(x2, prepared))
    assert out2.shape == (B2, out_dim), out2.shape
    assert jnp.allclose(out2, reference(x2, params), atol=1e-5, rtol=1e-5)

    # --- bf16 compute path (weights pre-cast once; f32 accumulate) ---------------------
    prepared_bf16 = prepare_params_for_tpu(params, compute_dtype=jnp.bfloat16)
    out_bf16 = jax.block_until_ready(fwd(x, prepared_bf16))
    assert out_bf16.shape == (batch, out_dim)
    # Loose tolerance: bf16 weights / per-layer bf16 activation cast, f32 accumulation.
    assert jnp.allclose(out_bf16, reference(x, params), atol=5e-2, rtol=5e-2)

    print("KERNEL_OK")
</pallas_src>

<mosaic_0001>
module attributes {stable_mosaic.version = 11 : i64} {
  func.func @_fused_mlp_kernel(%arg0: i32, %arg1: memref<8x32xf32, #tpu.memory_space<vmem>>, %arg2: memref<32x32xf32, #tpu.memory_space<vmem>>, %arg3: memref<1x32xf32, #tpu.memory_space<vmem>>, %arg4: memref<32x32xf32, #tpu.memory_space<vmem>>, %arg5: memref<1x32xf32, #tpu.memory_space<vmem>>, %arg6: memref<32x32xf32, #tpu.memory_space<vmem>>, %arg7: memref<1x32xf32, #tpu.memory_space<vmem>>, %arg8: memref<32x16xf32, #tpu.memory_space<vmem>>, %arg9: memref<1x16xf32, #tpu.memory_space<vmem>>, %arg10: memref<8x16xf32, #tpu.memory_space<vmem>>) attributes {dimension_semantics = [#tpu.dimension_semantics<parallel>], iteration_bounds = array<i64: 1>, scalar_prefetch = 0 : i64, scratch_operands = 0 : i64, tpu.core_type = #tpu.core_type<tc>, window_params = [{transform_indices = @transform_0, window_bounds = array<i64: 8, 32>}, {pipeline_mode = #tpu.pipeline_mode<synchronous>, transform_indices = @transform_1, window_bounds = array<i64: 32, 32>}, {pipeline_mode = #tpu.pipeline_mode<synchronous>, transform_indices = @transform_2, window_bounds = array<i64: 1, 32>}, {pipeline_mode = #tpu.pipeline_mode<synchronous>, transform_indices = @transform_3, window_bounds = array<i64: 32, 32>}, {pipeline_mode = #tpu.pipeline_mode<synchronous>, transform_indices = @transform_4, window_bounds = array<i64: 1, 32>}, {pipeline_mode = #tpu.pipeline_mode<synchronous>, transform_indices = @transform_5, window_bounds = array<i64: 32, 32>}, {pipeline_mode = #tpu.pipeline_mode<synchronous>, transform_indices = @transform_6, window_bounds = array<i64: 1, 32>}, {pipeline_mode = #tpu.pipeline_mode<synchronous>, transform_indices = @transform_7, window_bounds = array<i64: 32, 16>}, {pipeline_mode = #tpu.pipeline_mode<synchronous>, transform_indices = @transform_8, window_bounds = array<i64: 1, 16>}, {transform_indices = @transform_9, window_bounds = array<i64: 8, 16>}]} {
    %c0 = arith.constant 0 : index
    %c0_0 = arith.constant 0 : index
    %0 = vector.load %arg1[%c0, %c0_0] : memref<8x32xf32, #tpu.memory_space<vmem>>, vector<8x32xf32>
    %c0_1 = arith.constant 0 : index
    %c0_2 = arith.constant 0 : index
    %1 = vector.load %arg2[%c0_1, %c0_2] : memref<32x32xf32, #tpu.memory_space<vmem>>, vector<32x32xf32>
    %c0_3 = arith.constant 0 : index
    %c0_4 = arith.constant 0 : index
    %2 = vector.load %arg3[%c0_3, %c0_4] : memref<1x32xf32, #tpu.memory_space<vmem>>, vector<1x32xf32>
    %cst = arith.constant dense<0.000000e+00> : vector<8x32xf32>
    %3 = tpu.matmul %0, %1, %cst {dimension_numbers = #tpu.dot_dimension_numbers<[1], [0], [0], [1], [0, 0, 1, 1], [], []>} : vector<8x32xf32>, vector<32x32xf32>, vector<8x32xf32> -> vector<8x32xf32>
    %4 = vector.broadcast %2 : vector<1x32xf32> to vector<8x32xf32>
    %5 = arith.addf %3, %4 : vector<8x32xf32>
    %cst_5 = arith.constant 0.000000e+00 : f32
    %6 = vector.broadcast %cst_5 : f32 to vector<8x32xf32>
    %7 = arith.maximumf %5, %6 : vector<8x32xf32>
    %c0_6 = arith.constant 0 : index
    %c0_7 = arith.constant 0 : index
    %8 = vector.load %arg4[%c0_6, %c0_7] : memref<32x32xf32, #tpu.memory_space<vmem>>, vector<32x32xf32>
    %c0_8 = arith.constant 0 : index
    %c0_9 = arith.constant 0 : index
    %9 = vector.load %arg5[%c0_8, %c0_9] : memref<1x32xf32, #tpu.memory_space<vmem>>, vector<1x32xf32>
    %cst_10 = arith.constant dense<0.000000e+00> : vector<8x32xf32>
    %10 = tpu.matmul %7, %8, %cst_10 {dimension_numbers = #tpu.dot_dimension_numbers<[1], [0], [0], [1], [0, 0, 1, 1], [], []>} : vector<8x32xf32>, vector<32x32xf32>, vector<8x32xf32> -> vector<8x32xf32>
    %11 = vector.broadcast %9 : vector<1x32xf32> to vector<8x32xf32>
    %12 = arith.addf %10, %11 : vector<8x32xf32>
    %cst_11 = arith.constant 0.000000e+00 : f32
    %13 = vector.broadcast %cst_11 : f32 to vector<8x32xf32>
    %14 = arith.maximumf %12, %13 : vector<8x32xf32>
    %c0_12 = arith.constant 0 : index
    %c0_13 = arith.constant 0 : index
    %15 = vector.load %arg6[%c0_12, %c0_13] : memref<32x32xf32, #tpu.memory_space<vmem>>, vector<32x32xf32>
    %c0_14 = arith.constant 0 : index
    %c0_15 = arith.constant 0 : index
    %16 = vector.load %arg7[%c0_14, %c0_15] : memref<1x32xf32, #tpu.memory_space<vmem>>, vector<1x32xf32>
    %cst_16 = arith.constant dense<0.000000e+00> : vector<8x32xf32>
    %17 = tpu.matmul %14, %15, %cst_16 {dimension_numbers = #tpu.dot_dimension_numbers<[1], [0], [0], [1], [0, 0, 1, 1], [], []>} : vector<8x32xf32>, vector<32x32xf32>, vector<8x32xf32> -> vector<8x32xf32>
    %18 = vector.broadcast %16 : vector<1x32xf32> to vector<8x32xf32>
    %19 = arith.addf %17, %18 : vector<8x32xf32>
    %cst_17 = arith.constant 0.000000e+00 : f32
    %20 = vector.broadcast %cst_17 : f32 to vector<8x32xf32>
    %21 = arith.maximumf %19, %20 : vector<8x32xf32>
    %c0_18 = arith.constant 0 : index
    %c0_19 = arith.constant 0 : index
    %22 = vector.load %arg8[%c0_18, %c0_19] : memref<32x16xf32, #tpu.memory_space<vmem>>, vector<32x16xf32>
    %c0_20 = arith.constant 0 : index
    %c0_21 = arith.constant 0 : index
    %23 = vector.load %arg9[%c0_20, %c0_21] : memref<1x16xf32, #tpu.memory_space<vmem>>, vector<1x16xf32>
    %cst_22 = arith.constant dense<0.000000e+00> : vector<8x16xf32>
    %24 = tpu.matmul %21, %22, %cst_22 {dimension_numbers = #tpu.dot_dimension_numbers<[1], [0], [0], [1], [0, 0, 1, 1], [], []>} : vector<8x32xf32>, vector<32x16xf32>, vector<8x16xf32> -> vector<8x16xf32>
    %25 = vector.broadcast %23 : vector<1x16xf32> to vector<8x16xf32>
    %26 = arith.addf %24, %25 : vector<8x16xf32>
    %c0_23 = arith.constant 0 : index
    %c0_24 = arith.constant 0 : index
    %27 = vector.load %arg10[%c0_23, %c0_24] : memref<8x16xf32, #tpu.memory_space<vmem>>, vector<8x16xf32>
    tpu.vector_store %arg10[%c0_23, %c0_24], %26 {strides = array<i32>} : memref<8x16xf32, #tpu.memory_space<vmem>>, vector<8x16xf32>,
    return
  }
  func.func @transform_0(%arg0: i32) -> (i32, i32) {
    %c0_i32 = arith.constant 0 : i32
    %c0_i32_0 = arith.constant 0 : i32
    return %arg0, %c0_i32 : i32, i32
  }
  func.func @transform_1(%arg0: i32) -> (i32, i32) {
    %c0_i32 = arith.constant 0 : i32
    %c0_i32_0 = arith.constant 0 : i32
    %c0_i32_1 = arith.constant 0 : i32
    return %c0_i32, %c0_i32_0 : i32, i32
  }
  func.func @transform_2(%arg0: i32) -> (i32, i32) {
    %c0_i32 = arith.constant 0 : i32
    %c0_i32_0 = arith.constant 0 : i32
    %c0_i32_1 = arith.constant 0 : i32
    return %c0_i32, %c0_i32_0 : i32, i32
  }
  func.func @transform_3(%arg0: i32) -> (i32, i32) {
    %c0_i32 = arith.constant 0 : i32
    %c0_i32_0 = arith.constant 0 : i32
    %c0_i32_1 = arith.constant 0 : i32
    return %c0_i32, %c0_i32_0 : i32, i32
  }
  func.func @transform_4(%arg0: i32) -> (i32, i32) {
    %c0_i32 = arith.constant 0 : i32
    %c0_i32_0 = arith.constant 0 : i32
    %c0_i32_1 = arith.constant 0 : i32
    return %c0_i32, %c0_i32_0 : i32, i32
  }
  func.func @transform_5(%arg0: i32) -> (i32, i32) {
    %c0_i32 = arith.constant 0 : i32
    %c0_i32_0 = arith.constant 0 : i32
    %c0_i32_1 = arith.constant 0 : i32
    return %c0_i32, %c0_i32_0 : i32, i32
  }
  func.func @transform_6(%arg0: i32) -> (i32, i32) {
    %c0_i32 = arith.constant 0 : i32
    %c0_i32_0 = arith.constant 0 : i32
    %c0_i32_1 = arith.constant 0 : i32
    return %c0_i32, %c0_i32_0 : i32, i32
  }
  func.func @transform_7(%arg0: i32) -> (i32, i32) {
    %c0_i32 = arith.constant 0 : i32
    %c0_i32_0 = arith.constant 0 : i32
    %c0_i32_1 = arith.constant 0 : i32
    return %c0_i32, %c0_i32_0 : i32, i32
  }
  func.func @transform_8(%arg0: i32) -> (i32, i32) {
    %c0_i32 = arith.constant 0 : i32
    %c0_i32_0 = arith.constant 0 : i32
    %c0_i32_1 = arith.constant 0 : i32
    return %c0_i32, %c0_i32_0 : i32, i32
  }
  func.func @transform_9(%arg0: i32) -> (i32, i32) {
    %c0_i32 = arith.constant 0 : i32
    %c0_i32_0 = arith.constant 0 : i32
    return %arg0, %c0_i32 : i32, i32
  }
}

</mosaic_0001>

<llo_original>
// kernel: forecasting_model_forward.1
$region0: #{forecasting_model_forward.1}
  #allocation0 [shape = 'u32[]', space=smem, size = 0x4, offset = 0x4, fixed_abs, tag = 'smem constant byte address 0x4 - core index']
  #allocation1 [shape = 'u32[72,128]{1,0:T(1,128)}', space=vmem, size = 0x9000, scoped, tag = 'internal scratch']
  %s0 = inlined_call_operand.vmem [shape: f32[8,32], index: 0, kind: input, shape index: {}]
  %s1 = inlined_call_operand.vmem [shape: f32[32,32], index: 1, kind: input, shape index: {}]
  %s2 = inlined_call_operand.vmem [shape: f32[1,32], index: 2, kind: input, shape index: {}]
  %s3 = inlined_call_operand.hbm [shape: f32[32,32], index: 3, kind: input, shape index: {}]
  %s4 = inlined_call_operand.vmem [shape: f32[1,32], index: 4, kind: input, shape index: {}]
  %s5 = inlined_call_operand.hbm [shape: f32[32,32], index: 5, kind: input, shape index: {}]
  %s6 = inlined_call_operand.vmem [shape: f32[1,32], index: 6, kind: input, shape index: {}]
  %s7 = inlined_call_operand.vmem [shape: f32[32,16], index: 7, kind: input, shape index: {}]
  %s8 = inlined_call_operand.vmem [shape: f32[1,16], index: 8, kind: input, shape index: {}]
  %s9 = inlined_call_operand.hbm [shape: f32[8,16], index: 9, kind: output, shape index: {}]
  %s10 = sld [smem:[#allocation0]]
  $region54: #{forecasting_model_forward.1} parent=0
    _
  %s12 = ssub.s32 1, %s10
  %s13 = scalar_select 0, %s12, %s10
  $region1: #{forecasting_model_forward.1} parent=0
    #allocation2 [shape = 'u8[16384]{0}', space=vmem, size = 0x4000, scoped, tag = 'input window, operand 3, single buffered']
    #allocation3 [shape = 's32[1]{0}', space=sflag, size = 0x4, scoped, tag = 'scoped memory for forecasting_model_forward.1']
    #allocation4 [shape = 's32[1]{0}', space=sflag, size = 0x4, scoped, tag = 'scoped memory for forecasting_model_forward.1']
    #allocation5 [shape = 'u8[16384]{0}', space=vmem, size = 0x4000, scoped, tag = 'input window, operand 5, single buffered']
    #allocation6 [shape = 's32[1]{0}', space=sflag, size = 0x4, scoped, tag = 'scoped memory for forecasting_model_forward.1']
    #allocation7 [shape = 'u8[4096]{0}', space=vmem, size = 0x1000, scoped, tag = 'output window, operand 0, single buffered']
    %14 = vsyncpa [#allocation3], 0
    %15 = vsyncpa [#allocation6], 0
    %16 = vsyncpa [#allocation4], 0
    // Predicated region
    $region2: #{forecasting_model_forward.1} parent=1 // pred_check
      _
    $region3: #{forecasting_model_forward.1} parent=1 // pred_check_branch
      %18 = sbr.rel (0) target = $region5
    $region4: #{forecasting_model_forward.1} parent=1 // pred_region
      _
    $region5: #{forecasting_model_forward.1} parent=1 // pred_fallthru
      _
    // Predicated region
    $region6: #{forecasting_model_forward.1} parent=1 // pred_check
      _
    $region7: #{forecasting_model_forward.1} parent=1 // pred_check_branch
      %20 = sbr.rel (0) target = $region9
    $region8: #{forecasting_model_forward.1} parent=1 // pred_region
      _
    $region9: #{forecasting_model_forward.1} parent=1 // pred_fallthru
      _
    // Predicated region
    $region10: #{forecasting_model_forward.1} parent=1 // pred_check
      _
    $region11: #{forecasting_model_forward.1} parent=1 // pred_check_branch
      %22 = sbr.rel (0) target = $region13
    $region12: #{forecasting_model_forward.1} parent=1 // pred_region
      _
    $region13: #{forecasting_model_forward.1} parent=1 // pred_fallthru
      _
    // Predicated region
    $region14: #{forecasting_model_forward.1} parent=1 // pred_check
      _
    $region15: #{forecasting_model_forward.1} parent=1 // pred_check_branch
      %24 = sbr.rel (0) target = $region17
    $region16: #{forecasting_model_forward.1} parent=1 // pred_region
      %26 = vsyncadd [#allocation3], 0
      %s27 = sshll.u32 %s3, 4
      %s28 = int_to_ptr.hbm [resolvable:$true] %s27
      %s29 = sshll.u32 [#allocation2], 4
      %s30 = int_to_ptr.vmem [resolvable:$true] %s29
      %35 = dma.hbm_to_vmem [thread:$0]  %s28, 512, %s30, [#allocation3], 128, 128, 8
    $region17: #{forecasting_model_forward.1} parent=1 // pred_fallthru
      _
    // Predicated region
    $region18: #{forecasting_model_forward.1} parent=1 // pred_check
      _
    $region19: #{forecasting_model_forward.1} parent=1 // pred_check_branch
      %37 = sbr.rel (0) target = $region21
    $region20: #{forecasting_model_forward.1} parent=1 // pred_region
      _
    $region21: #{forecasting_model_forward.1} parent=1 // pred_fallthru
      _
    // Predicated region
    $region22: #{forecasting_model_forward.1} parent=1 // pred_check
      _
    $region23: #{forecasting_model_forward.1} parent=1 // pred_check_branch
      %39 = sbr.rel (0) target = $region25
    $region24: #{forecasting_model_forward.1} parent=1 // pred_region
      %41 = vsyncadd [#allocation6], 0
      %s42 = sshll.u32 %s5, 4
      %s43 = int_to_ptr.hbm [resolvable:$true] %s42
      %s44 = sshll.u32 [#allocation5], 4
      %s45 = int_to_ptr.vmem [resolvable:$true] %s44
      %50 = dma.hbm_to_vmem [thread:$0]  %s43, 512, %s45, [#allocation6], 128, 128, 8
    $region25: #{forecasting_model_forward.1} parent=1 // pred_fallthru
      _
    // Predicated region
    $region26: #{forecasting_model_forward.1} parent=1 // pred_check
      _
    $region27: #{forecasting_model_forward.1} parent=1 // pred_check_branch
      %52 = sbr.rel (0) target = $region29
    $region28: #{forecasting_model_forward.1} parent=1 // pred_region
      _
    $region29: #{forecasting_model_forward.1} parent=1 // pred_fallthru
      _
    // Predicated region
    $region30: #{forecasting_model_forward.1} parent=1 // pred_check
      _
    $region31: #{forecasting_model_forward.1} parent=1 // pred_check_branch
      %54 = sbr.rel (0) target = $region33
    $region32: #{forecasting_model_forward.1} parent=1 // pred_region
      _
    $region33: #{forecasting_model_forward.1} parent=1 // pred_fallthru
      _
    // Predicated region
    $region34: #{forecasting_model_forward.1} parent=1 // pred_check
      _
    $region35: #{forecasting_model_forward.1} parent=1 // pred_check_branch
      %56 = sbr.rel (0) target = $region37
    $region36: #{forecasting_model_forward.1} parent=1 // pred_region
      _
    $region37: #{forecasting_model_forward.1} parent=1 // pred_fallthru
      _
    // Predicated region
    $region38: #{forecasting_model_forward.1} parent=1 // pred_check
      _
    $region39: #{forecasting_model_forward.1} parent=1 // pred_check_branch
      %58 = sbr.rel (0) target = $region41
    $region40: #{forecasting_model_forward.1} parent=1 // pred_region
      %60 = dma.done [#allocation3], 512
    $region41: #{forecasting_model_forward.1} parent=1 // pred_fallthru
      _
    // Predicated region
    $region42: #{forecasting_model_forward.1} parent=1 // pred_check
      _
    $region43: #{forecasting_model_forward.1} parent=1 // pred_check_branch
      %62 = sbr.rel (0) target = $region45
    $region44: #{forecasting_model_forward.1} parent=1 // pred_region
      %64 = dma.done [#allocation6], 512
    $region45: #{forecasting_model_forward.1} parent=1 // pred_fallthru
      _
    %v65 = vld [vmem:[%s0] sm:$0xff]
    %v66 = vld [vmem:[%s1] sm:$0xff]
    %v67 = vld [vmem:[%s1 + $0x8] sm:$0xff]
    %v68 = vld [vmem:[%s1 + $0x10] sm:$0xff]
    %v69 = vld [vmem:[%s1 + $0x18] sm:$0xff]
    %v70 = vld [vmem:[%s2] sm:$0x1]
    %v72 = vperm.slane %v70, 0
    %vm74 = vcmask 261120
    %v76 = vsel %vm74, %v65, 0
    %78 = vmatpush.msra.mxu0 0.0
    %79 = vmatpush.msra.mxu0 0.0
    %80 = vmatpush.msra.mxu0 0.0
    %81 = vmatpush.msra.mxu0 0.0
    %82 = vmatpush.msra.mxu0 0.0
    %83 = vmatpush.msra.mxu0 0.0
    %84 = vmatpush.msra.mxu0 0.0
    %85 = vmatpush.msra.mxu0 0.0
    %86 = vmatpush.msra.mxu0 0.0
    %87 = vmatpush.msra.mxu0 0.0
    %88 = vmatpush.msra.mxu0 0.0
    %89 = vmatpush.msra.mxu0 0.0
    %90 = vmatpush.msra.mxu0 %v69
    %91 = vmatpush.msra.mxu0 %v68
    %92 = vmatpush.msra.mxu0 %v67
    %93 = vmatpush.msra.mxu0 %v66
    %94 = vmatmul.f32.gmra.mxu0 %v76
    %v95 = vpop.f32.mrf.mxu0
    %v96 = vadd.f32 %v72, %v95
    %97 = vdwg.mxu0
    %v98 = vmax.f32 %v96, 0.0
    %v99 = vld [vmem:[#allocation2] sm:$0xff]
    %v100 = vld [vmem:[#allocation2 + $0x8] sm:$0xff]
    %v101 = vld [vmem:[#allocation2 + $0x10] sm:$0xff]
    %v102 = vld [vmem:[#allocation2 + $0x18] sm:$0xff]
    %v103 = vld [vmem:[%s4] sm:$0x1]
    %v105 = vperm.slane %v103, 0
    %v108 = vsel %vm74, %v98, 0
    %110 = vmatpush.msra.mxu0 0.0
    %111 = vmatpush.msra.mxu0 0.0
    %112 = vmatpush.msra.mxu0 0.0
    %113 = vmatpush.msra.mxu0 0.0
    %114 = vmatpush.msra.mxu0 0.0
    %115 = vmatpush.msra.mxu0 0.0
    %116 = vmatpush.msra.mxu0 0.0
    %117 = vmatpush.msra.mxu0 0.0
    %118 = vmatpush.msra.mxu0 0.0
    %119 = vmatpush.msra.mxu0 0.0
    %120 = vmatpush.msra.mxu0 0.0
    %121 = vmatpush.msra.mxu0 0.0
    %122 = vmatpush.msra.mxu0 %v102
    %123 = vmatpush.msra.mxu0 %v101
    %124 = vmatpush.msra.mxu0 %v100
    %125 = vmatpush.msra.mxu0 %v99
    %126 = vmatmul.f32.gmra.mxu0 %v108
    %v127 = vpop.f32.mrf.mxu0
    %v128 = vadd.f32 %v105, %v127
    %129 = vdwg.mxu0
    %v130 = vmax.f32 %v128, 0.0
    %v131 = vld [vmem:[#allocation5] sm:$0xff]
    %v132 = vld [vmem:[#allocation5 + $0x8] sm:$0xff]
    %v133 = vld [vmem:[#allocation5 + $0x10] sm:$0xff]
    %v134 = vld [vmem:[#allocation5 + $0x18] sm:$0xff]
    %v135 = vld [vmem:[%s6] sm:$0x1]
    %v137 = vperm.slane %v135, 0
    %v140 = vsel %vm74, %v130, 0
    %142 = vmatpush.msra.mxu0 0.0
    %143 = vmatpush.msra.mxu0 0.0
    %144 = vmatpush.msra.mxu0 0.0
    %145 = vmatpush.msra.mxu0 0.0
    %146 = vmatpush.msra.mxu0 0.0
    %147 = vmatpush.msra.mxu0 0.0
    %148 = vmatpush.msra.mxu0 0.0
    %149 = vmatpush.msra.mxu0 0.0
    %150 = vmatpush.msra.mxu0 0.0
    %151 = vmatpush.msra.mxu0 0.0
    %152 = vmatpush.msra.mxu0 0.0
    %153 = vmatpush.msra.mxu0 0.0
    %154 = vmatpush.msra.mxu0 %v134
    %155 = vmatpush.msra.mxu0 %v133
    %156 = vmatpush.msra.mxu0 %v132
    %157 = vmatpush.msra.mxu0 %v131
    %158 = vmatmul.f32.gmra.mxu0 %v140
    %v159 = vpop.f32.mrf.mxu0
    %v160 = vadd.f32 %v137, %v159
    %161 = vdwg.mxu0
    %v162 = vmax.f32 %v160, 0.0
    %v163 = vld [vmem:[%s7] sm:$0xff]
    %v164 = vld [vmem:[%s7 + $0x8] sm:$0xff]
    %v165 = vld [vmem:[%s7 + $0x10] sm:$0xff]
    %v166 = vld [vmem:[%s7 + $0x18] sm:$0xff]
    %v167 = vld [vmem:[%s8] sm:$0x1]
    %v169 = vperm.slane %v167, 0
    %v172 = vsel %vm74, %v162, 0
    %174 = vmatpush.msra.mxu0 0.0
    %175 = vmatpush.msra.mxu0 0.0
    %176 = vmatpush.msra.mxu0 0.0
    %177 = vmatpush.msra.mxu0 0.0
    %178 = vmatpush.msra.mxu0 0.0
    %179 = vmatpush.msra.mxu0 0.0
    %180 = vmatpush.msra.mxu0 0.0
    %181 = vmatpush.msra.mxu0 0.0
    %182 = vmatpush.msra.mxu0 0.0
    %183 = vmatpush.msra.mxu0 0.0
    %184 = vmatpush.msra.mxu0 0.0
    %185 = vmatpush.msra.mxu0 0.0
    %186 = vmatpush.msra.mxu0 %v166
    %187 = vmatpush.msra.mxu0 %v165
    %188 = vmatpush.msra.mxu0 %v164
    %189 = vmatpush.msra.mxu0 %v163
    %190 = vmatmul.f32.gmra.mxu0 %v172
    %v191 = vpop.f32.mrf.mxu0
    %v192 = vadd.f32 %v169, %v191
    %193 = vdwg.mxu0
    %vm194 = vcmask 130048
    %195 = vst.msk [vmem:[#allocation7] sm:$0xff] %vm194, %v192
    // Predicated region
    $region46: #{forecasting_model_forward.1} parent=1 // pred_check
      _
    $region47: #{forecasting_model_forward.1} parent=1 // pred_check_branch
      %197 = sbr.rel (0) target = $region49
    $region48: #{forecasting_model_forward.1} parent=1 // pred_region
      %199 = vsyncadd [#allocation4], 0
      %s201 = sshll.u32 [#allocation7], 4
      %s202 = int_to_ptr.vmem [resolvable:$true] %s201
      %s203 = sshll.u32 %s9, 4
      %s204 = int_to_ptr.hbm [resolvable:$true] %s203
      %206 = dma.vmem_to_hbm [thread:$0]  %s202, 128, %s204, [#allocation4]
    $region49: #{forecasting_model_forward.1} parent=1 // pred_fallthru
      _
    // Predicated region
    $region50: #{forecasting_model_forward.1} parent=1 // pred_check
      _
    $region51: #{forecasting_model_forward.1} parent=1 // pred_check_branch
      %208 = sbr.rel (0) target = $region53
    $region52: #{forecasting_model_forward.1} parent=1 // pred_region
      %210 = dma.done [#allocation4], 128
    $region53: #{forecasting_model_forward.1} parent=1 // pred_fallthru
      _
    %211 = vsyncpa [#allocation3], 1
    %212 = vsyncpa [#allocation6], 1
    %213 = vsyncpa [#allocation4], 1

</llo_original>
